<compile_context>
chip_gen: v7x
topology: tpu7x:2x2x1
jax: 0.10.0
libtpu: 0.0.40
codegen_flags: <defaults>
</compile_context>

<pallas_src>
import functools
import math

import jax
import jax.numpy as jnp
from jax import lax
from jax.experimental import pallas as pl
from jax.experimental.pallas import tpu as pltpu

# --------------------------------------------------------------------------- #
# Hyperparameters (module __init__ defaults, made explicit & deterministic).
# --------------------------------------------------------------------------- #
R_MAX = 4.0           # basis / cutoff radial cutoff
NUM_BASIS = 8         # BesselBasis.num_basis -> irreps_out = num_basis x 0e
CUTOFF_N = 6          # TanhCutoff exponent (integer)
PREFACTOR = 2.0 / R_MAX
INV_R_MAX = 1.0 / R_MAX
TANH1_POW_N = math.tanh(1.0) ** CUTOFF_N
SCALE = PREFACTOR / TANH1_POW_N        # prefactor and 1/tanh(1)^6 folded once

MIN_TILE = 1024       # edges; -> (8, 128) aligned sublane/lane tile
TE_MAX = 32768        # max edges per grid step (multiple of MIN_TILE)


def _round_up(n: int, m: int) -> int:
    return ((n + m - 1) // m) * m


def _tiling(num_edges: int, te_max: int) -> tuple[int, int]:
    """Pick (edges_per_grid_step, padded_total_edges)."""
    te_max = max(MIN_TILE, _round_up(te_max, MIN_TILE))
    e_pad = _round_up(max(num_edges, 1), MIN_TILE)
    n_steps = max(1, -(-e_pad // te_max))
    if e_pad > MIN_TILE and n_steps == 1:
        # Keep >= 2 grid steps when there is enough work so v7x megacore
        # ("parallel") can shard across both TensorCores.
        n_steps = 2
    te = _round_up(-(-e_pad // n_steps), MIN_TILE)
    return te, te * n_steps


def _edge_radial_kernel(w_ref, vec_ref, out_ref, *, harmonic: bool):
    """One lane/sublane-dense tile of edges: length -> Bessel basis * cutoff.

    w_ref   : (NUM_BASIS,)          f32  SMEM  bessel weights (k * pi at init)
    vec_ref : (3, r_tile, 128)      f32  VMEM  edge displacement vectors
    out_ref : (NUM_BASIS, r_tile, 128)         radial attrs
    """
    v0 = vec_ref[0]                                     # (r_tile, 128)
    v1 = vec_ref[1]
    v2 = vec_ref[2]

    # Squared length: dense VPU FMAs, no cross-lane (XLU) reduce.  Clamp
    # before BOTH rsqrt and the |vec| reconstruction so zero-length / padded
    # edges get x = 1e-12 and the basis hits the finite sinc limit w_k/r_max.
    x2 = jnp.maximum(v0 * v0 + v1 * v1 + v2 * v2, jnp.float32(1e-24))
    inv_x = lax.rsqrt(x2)                               # EUP
    x = x2 * inv_x                                      # == |vec|
    xr = x * jnp.float32(INV_R_MAX)                     # x / r_max (reused)

    # TanhCutoff: tanh(1 - x/r_max)^6 / tanh(1)^6, explicit multiplies (no
    # float pow), folded with the Bessel prefactor and 1/x into one factor.
    t = jnp.tanh(1.0 - xr)                              # EUP
    t2 = t * t
    common = (t2 * t2 * t2) * inv_x * jnp.float32(SCALE)

    if harmonic:
        # Weights frozen at the k*pi init: sin(k*theta) via the recurrence
        # sin((k+1)t) = 2*cos(t)*sin(k*t) - sin((k-1)*t)  -> 2 EUP pushes total,
        # the rest is 4-wide VALU work.
        theta = xr * jnp.float32(math.pi)
        s_k = jnp.sin(theta)                            # sin(1*theta)
        c2 = 2.0 * jnp.cos(theta)
        s_prev = jnp.zeros_like(s_k)                    # sin(0*theta)
        for k in range(NUM_BASIS):
            out_ref[k] = (s_k * common).astype(out_ref.dtype)
            s_prev, s_k = s_k, c2 * s_k - s_prev
    else:
        # General (trainable) weights: one SMEM scalar read + one sin per row.
        for k in range(NUM_BASIS):
            w_k = w_ref[k] * jnp.float32(INV_R_MAX)
            out_ref[k] = (jnp.sin(x * w_k) * common).astype(out_ref.dtype)


def basis_edge_radial_attrs(pos: jax.Array, edge_index: jax.Array,
                            bessel_weights: jax.Array, *,
                            harmonic: bool = False,
                            out_dtype=jnp.float32,
                            channel_major: bool = False,
                            te_max: int = TE_MAX) -> jax.Array:
    """Pallas implementation of BasisEdgeRadialAttrs.forward.

    pos            : (N, 3)  node positions
    edge_index     : (2, E)  int32, rows = (source, target)
    bessel_weights : (NUM_BASIS,) f32
    harmonic       : set True only if weights are known to equal the k*pi init
    returns        : (E, NUM_BASIS) (or (NUM_BASIS, E) if channel_major=True)
    """
    src = edge_index[0]
    dst = edge_index[1]
    # AtomicDataDict.with_edge_vectors(with_lengths=True) glue, done directly
    # in lane-major (3, E) layout (no (E, 3) materialize + pad + transpose).
    # TODO(synk): optionally fuse this gather into the kernel (pos resident in
    # VMEM + edge_index tiles) to also save the edge_vec HBM round-trip.
    pos_t = pos.T.astype(jnp.float32)                          # (3, N)
    edge_vec_t = pos_t[:, dst] - pos_t[:, src]                 # (3, E)

    E = edge_vec_t.shape[1]
    te, e_total = _tiling(E, te_max)
    r_tile = te // 128                                         # multiple of 8
    rows = e_total // 128

    vec = jnp.pad(edge_vec_t, ((0, 0), (0, e_total - E))).reshape(3, rows, 128)
    w = bessel_weights.reshape(NUM_BASIS).astype(jnp.float32)

    out = pl.pallas_call(
        functools.partial(_edge_radial_kernel, harmonic=harmonic),
        out_shape=jax.ShapeDtypeStruct((NUM_BASIS, rows, 128), out_dtype),
        grid_spec=pltpu.PrefetchScalarGridSpec(
            num_scalar_prefetch=0,
            grid=(e_total // te,),
            in_specs=[
                pl.BlockSpec(memory_space=pltpu.MemorySpace.SMEM),     # weights
                pl.BlockSpec((3, r_tile, 128), lambda i: (0, i, 0)),   # edge vecs
            ],
            out_specs=pl.BlockSpec((NUM_BASIS, r_tile, 128),
                                   lambda i: (0, i, 0)),
        ),
        compiler_params=pltpu.CompilerParams(
            dimension_semantics=("parallel",)),
    )(w, vec)

    out = out.reshape(NUM_BASIS, e_total)[:, :E]
    if channel_major:
        return out                                             # (NUM_BASIS, E)
    # Module convention is (E, NUM_BASIS).
    # TODO(synk): keep channel-major and fuse this transpose into the consumer.
    return out.T


def _reference(pos, edge_index, bessel_weights):
    """Pure-JAX reference of the PyTorch forward (integer cutoff exponent)."""
    src, dst = edge_index[0], edge_index[1]
    vec = (pos[dst] - pos[src]).astype(jnp.float32)
    x = jnp.linalg.norm(vec, axis=-1, keepdims=True)
    basis = PREFACTOR * jnp.sin(bessel_weights[None, :] * x / R_MAX) / x
    cutoff = jnp.tanh(1.0 - x / R_MAX) ** CUTOFF_N / TANH1_POW_N
    return basis * cutoff


if __name__ == "__main__":
    key = jax.random.PRNGKey(0)
    k_pos, k_src, k_off = jax.random.split(key, 3)

    N_NODES = 32
    N_EDGES = 256

    pos = jax.random.normal(k_pos, (N_NODES, 3), dtype=jnp.float32) * 1.5

    # Deterministic edge_index with src != dst (avoids zero-length edges in the
    # reference, which would be NaN there; the kernel itself is safe for
    # zero-length / padded edges and returns the sinc limit).
    src = jax.random.randint(k_src, (N_EDGES,), 0, N_NODES, dtype=jnp.int32)
    off = jax.random.randint(k_off, (N_EDGES,), 1, N_NODES, dtype=jnp.int32)
    dst = (src + off) % N_NODES
    edge_index = jnp.stack([src, dst], axis=0)

    # Deterministic BesselBasis parameter init: linspace(1, num_basis) * pi.
    bessel_weights = (jnp.linspace(1.0, NUM_BASIS, NUM_BASIS, dtype=jnp.float32)
                      * jnp.pi)

    ref = _reference(pos, edge_index, bessel_weights)

    # General (trainable-weight) path.
    out = jax.block_until_ready(
        basis_edge_radial_attrs(pos, edge_index, bessel_weights))
    assert out.shape == (N_EDGES, NUM_BASIS)
    assert bool(jnp.all(jnp.isfinite(out)))
    assert jnp.allclose(out, ref, atol=1e-5, rtol=1e-5)

    # Harmonic fast path (weights at the deterministic k*pi init); slightly
    # looser atol to absorb the f32 rounding of the sine recurrence.
    out_h = jax.block_until_ready(
        basis_edge_radial_attrs(pos, edge_index, bessel_weights, harmonic=True))
    assert out_h.shape == (N_EDGES, NUM_BASIS)
    assert bool(jnp.all(jnp.isfinite(out_h)))
    assert jnp.allclose(out_h, ref, atol=5e-5, rtol=1e-5)

    print("KERNEL_OK")
</pallas_src>

<mosaic_0001>
module attributes {stable_mosaic.version = 11 : i64} {
  func.func @_edge_radial_kernel(%arg0: i32, %arg1: memref<8xf32, #tpu.memory_space<smem>>, %arg2: memref<3x8x128xf32, #tpu.memory_space<vmem>>, %arg3: memref<8x8x128xf32, #tpu.memory_space<vmem>>) attributes {dimension_semantics = [#tpu.dimension_semantics<parallel>], iteration_bounds = array<i64: 1>, scalar_prefetch = 0 : i64, scratch_operands = 0 : i64, tpu.core_type = #tpu.core_type<tc>, window_params = [{transform_indices = @transform_0, window_bounds = array<i64: 8>}, {transform_indices = @transform_1, window_bounds = array<i64: 3, 8, 128>}, {transform_indices = @transform_2, window_bounds = array<i64: 8, 8, 128>}]} {
    %c0 = arith.constant 0 : index
    %c0_0 = arith.constant 0 : index
    %c0_1 = arith.constant 0 : index
    %0 = vector.load %arg2[%c0, %c0_0, %c0_1] : memref<3x8x128xf32, #tpu.memory_space<vmem>>, vector<1x8x128xf32>
    %1 = vector.shape_cast %0 : vector<1x8x128xf32> to vector<8x128xf32>
    %c1 = arith.constant 1 : index
    %c0_2 = arith.constant 0 : index
    %c0_3 = arith.constant 0 : index
    %2 = vector.load %arg2[%c1, %c0_2, %c0_3] : memref<3x8x128xf32, #tpu.memory_space<vmem>>, vector<1x8x128xf32>
    %3 = vector.shape_cast %2 : vector<1x8x128xf32> to vector<8x128xf32>
    %c2 = arith.constant 2 : index
    %c0_4 = arith.constant 0 : index
    %c0_5 = arith.constant 0 : index
    %4 = vector.load %arg2[%c2, %c0_4, %c0_5] : memref<3x8x128xf32, #tpu.memory_space<vmem>>, vector<1x8x128xf32>
    %5 = vector.shape_cast %4 : vector<1x8x128xf32> to vector<8x128xf32>
    %6 = arith.mulf %1, %1 : vector<8x128xf32>
    %7 = arith.mulf %3, %3 : vector<8x128xf32>
    %8 = arith.addf %6, %7 : vector<8x128xf32>
    %9 = arith.mulf %5, %5 : vector<8x128xf32>
    %10 = arith.addf %8, %9 : vector<8x128xf32>
    %cst = arith.constant 1.000000e-24 : f32
    %11 = vector.broadcast %cst : f32 to vector<8x128xf32>
    %12 = arith.maximumf %10, %11 : vector<8x128xf32>
    %13 = math.rsqrt %12 : vector<8x128xf32>
    %14 = arith.mulf %12, %13 : vector<8x128xf32>
    %cst_6 = arith.constant 2.500000e-01 : f32
    %15 = vector.broadcast %cst_6 : f32 to vector<8x128xf32>
    %16 = arith.mulf %14, %15 : vector<8x128xf32>
    %cst_7 = arith.constant 1.000000e+00 : f32
    %17 = vector.broadcast %cst_7 : f32 to vector<8x128xf32>
    %18 = arith.subf %17, %16 : vector<8x128xf32>
    %19 = math.tanh %18 : vector<8x128xf32>
    %20 = arith.mulf %19, %19 : vector<8x128xf32>
    %21 = arith.mulf %20, %20 : vector<8x128xf32>
    %22 = arith.mulf %21, %20 : vector<8x128xf32>
    %23 = arith.mulf %22, %13 : vector<8x128xf32>
    %cst_8 = arith.constant 2.56229067 : f32
    %24 = vector.broadcast %cst_8 : f32 to vector<8x128xf32>
    %25 = arith.mulf %23, %24 : vector<8x128xf32>
    %c0_9 = arith.constant 0 : index
    %26 = memref.load %arg1[%c0_9] : memref<8xf32, #tpu.memory_space<smem>>
    %cst_10 = arith.constant 2.500000e-01 : f32
    %27 = arith.mulf %26, %cst_10 : f32
    %28 = vector.broadcast %27 : f32 to vector<8x128xf32>
    %29 = arith.mulf %14, %28 : vector<8x128xf32>
    %30 = math.sin %29 : vector<8x128xf32>
    %31 = arith.mulf %30, %25 : vector<8x128xf32>
    %c0_11 = arith.constant 0 : index
    %c0_12 = arith.constant 0 : index
    %c0_13 = arith.constant 0 : index
    %32 = vector.load %arg3[%c0_11, %c0_12, %c0_13] : memref<8x8x128xf32, #tpu.memory_space<vmem>>, vector<1x8x128xf32>
    %33 = vector.shape_cast %32 : vector<1x8x128xf32> to vector<8x128xf32>
    %34 = vector.shape_cast %31 : vector<8x128xf32> to vector<1x8x128xf32>
    tpu.vector_store %arg3[%c0_11, %c0_12, %c0_13], %34 {strides = array<i32>} : memref<8x8x128xf32, #tpu.memory_space<vmem>>, vector<1x8x128xf32>,
    %c1_14 = arith.constant 1 : index
    %35 = memref.load %arg1[%c1_14] : memref<8xf32, #tpu.memory_space<smem>>
    %cst_15 = arith.constant 2.500000e-01 : f32
    %36 = arith.mulf %35, %cst_15 : f32
    %37 = vector.broadcast %36 : f32 to vector<8x128xf32>
    %38 = arith.mulf %14, %37 : vector<8x128xf32>
    %39 = math.sin %38 : vector<8x128xf32>
    %40 = arith.mulf %39, %25 : vector<8x128xf32>
    %c1_16 = arith.constant 1 : index
    %c0_17 = arith.constant 0 : index
    %c0_18 = arith.constant 0 : index
    %41 = vector.load %arg3[%c1_16, %c0_17, %c0_18] : memref<8x8x128xf32, #tpu.memory_space<vmem>>, vector<1x8x128xf32>
    %42 = vector.shape_cast %41 : vector<1x8x128xf32> to vector<8x128xf32>
    %43 = vector.shape_cast %40 : vector<8x128xf32> to vector<1x8x128xf32>
    tpu.vector_store %arg3[%c1_16, %c0_17, %c0_18], %43 {strides = array<i32>} : memref<8x8x128xf32, #tpu.memory_space<vmem>>, vector<1x8x128xf32>,
    %c2_19 = arith.constant 2 : index
    %44 = memref.load %arg1[%c2_19] : memref<8xf32, #tpu.memory_space<smem>>
    %cst_20 = arith.constant 2.500000e-01 : f32
    %45 = arith.mulf %44, %cst_20 : f32
    %46 = vector.broadcast %45 : f32 to vector<8x128xf32>
    %47 = arith.mulf %14, %46 : vector<8x128xf32>
    %48 = math.sin %47 : vector<8x128xf32>
    %49 = arith.mulf %48, %25 : vector<8x128xf32>
    %c2_21 = arith.constant 2 : index
    %c0_22 = arith.constant 0 : index
    %c0_23 = arith.constant 0 : index
    %50 = vector.load %arg3[%c2_21, %c0_22, %c0_23] : memref<8x8x128xf32, #tpu.memory_space<vmem>>, vector<1x8x128xf32>
    %51 = vector.shape_cast %50 : vector<1x8x128xf32> to vector<8x128xf32>
    %52 = vector.shape_cast %49 : vector<8x128xf32> to vector<1x8x128xf32>
    tpu.vector_store %arg3[%c2_21, %c0_22, %c0_23], %52 {strides = array<i32>} : memref<8x8x128xf32, #tpu.memory_space<vmem>>, vector<1x8x128xf32>,
    %c3 = arith.constant 3 : index
    %53 = memref.load %arg1[%c3] : memref<8xf32, #tpu.memory_space<smem>>
    %cst_24 = arith.constant 2.500000e-01 : f32
    %54 = arith.mulf %53, %cst_24 : f32
    %55 = vector.broadcast %54 : f32 to vector<8x128xf32>
    %56 = arith.mulf %14, %55 : vector<8x128xf32>
    %57 = math.sin %56 : vector<8x128xf32>
    %58 = arith.mulf %57, %25 : vector<8x128xf32>
    %c3_25 = arith.constant 3 : index
    %c0_26 = arith.constant 0 : index
    %c0_27 = arith.constant 0 : index
    %59 = vector.load %arg3[%c3_25, %c0_26, %c0_27] : memref<8x8x128xf32, #tpu.memory_space<vmem>>, vector<1x8x128xf32>
    %60 = vector.shape_cast %59 : vector<1x8x128xf32> to vector<8x128xf32>
    %61 = vector.shape_cast %58 : vector<8x128xf32> to vector<1x8x128xf32>
    tpu.vector_store %arg3[%c3_25, %c0_26, %c0_27], %61 {strides = array<i32>} : memref<8x8x128xf32, #tpu.memory_space<vmem>>, vector<1x8x128xf32>,
    %c4 = arith.constant 4 : index
    %62 = memref.load %arg1[%c4] : memref<8xf32, #tpu.memory_space<smem>>
    %cst_28 = arith.constant 2.500000e-01 : f32
    %63 = arith.mulf %62, %cst_28 : f32
    %64 = vector.broadcast %63 : f32 to vector<8x128xf32>
    %65 = arith.mulf %14, %64 : vector<8x128xf32>
    %66 = math.sin %65 : vector<8x128xf32>
    %67 = arith.mulf %66, %25 : vector<8x128xf32>
    %c4_29 = arith.constant 4 : index
    %c0_30 = arith.constant 0 : index
    %c0_31 = arith.constant 0 : index
    %68 = vector.load %arg3[%c4_29, %c0_30, %c0_31] : memref<8x8x128xf32, #tpu.memory_space<vmem>>, vector<1x8x128xf32>
    %69 = vector.shape_cast %68 : vector<1x8x128xf32> to vector<8x128xf32>
    %70 = vector.shape_cast %67 : vector<8x128xf32> to vector<1x8x128xf32>
    tpu.vector_store %arg3[%c4_29, %c0_30, %c0_31], %70 {strides = array<i32>} : memref<8x8x128xf32, #tpu.memory_space<vmem>>, vector<1x8x128xf32>,
    %c5 = arith.constant 5 : index
    %71 = memref.load %arg1[%c5] : memref<8xf32, #tpu.memory_space<smem>>
    %cst_32 = arith.constant 2.500000e-01 : f32
    %72 = arith.mulf %71, %cst_32 : f32
    %73 = vector.broadcast %72 : f32 to vector<8x128xf32>
    %74 = arith.mulf %14, %73 : vector<8x128xf32>
    %75 = math.sin %74 : vector<8x128xf32>
    %76 = arith.mulf %75, %25 : vector<8x128xf32>
    %c5_33 = arith.constant 5 : index
    %c0_34 = arith.constant 0 : index
    %c0_35 = arith.constant 0 : index
    %77 = vector.load %arg3[%c5_33, %c0_34, %c0_35] : memref<8x8x128xf32, #tpu.memory_space<vmem>>, vector<1x8x128xf32>
    %78 = vector.shape_cast %77 : vector<1x8x128xf32> to vector<8x128xf32>
    %79 = vector.shape_cast %76 : vector<8x128xf32> to vector<1x8x128xf32>
    tpu.vector_store %arg3[%c5_33, %c0_34, %c0_35], %79 {strides = array<i32>} : memref<8x8x128xf32, #tpu.memory_space<vmem>>, vector<1x8x128xf32>,
    %c6 = arith.constant 6 : index
    %80 = memref.load %arg1[%c6] : memref<8xf32, #tpu.memory_space<smem>>
    %cst_36 = arith.constant 2.500000e-01 : f32
    %81 = arith.mulf %80, %cst_36 : f32
    %82 = vector.broadcast %81 : f32 to vector<8x128xf32>
    %83 = arith.mulf %14, %82 : vector<8x128xf32>
    %84 = math.sin %83 : vector<8x128xf32>
    %85 = arith.mulf %84, %25 : vector<8x128xf32>
    %c6_37 = arith.constant 6 : index
    %c0_38 = arith.constant 0 : index
    %c0_39 = arith.constant 0 : index
    %86 = vector.load %arg3[%c6_37, %c0_38, %c0_39] : memref<8x8x128xf32, #tpu.memory_space<vmem>>, vector<1x8x128xf32>
    %87 = vector.shape_cast %86 : vector<1x8x128xf32> to vector<8x128xf32>
    %88 = vector.shape_cast %85 : vector<8x128xf32> to vector<1x8x128xf32>
    tpu.vector_store %arg3[%c6_37, %c0_38, %c0_39], %88 {strides = array<i32>} : memref<8x8x128xf32, #tpu.memory_space<vmem>>, vector<1x8x128xf32>,
    %c7 = arith.constant 7 : index
    %89 = memref.load %arg1[%c7] : memref<8xf32, #tpu.memory_space<smem>>
    %cst_40 = arith.constant 2.500000e-01 : f32
    %90 = arith.mulf %89, %cst_40 : f32
    %91 = vector.broadcast %90 : f32 to vector<8x128xf32>
    %92 = arith.mulf %14, %91 : vector<8x128xf32>
    %93 = math.sin %92 : vector<8x128xf32>
    %94 = arith.mulf %93, %25 : vector<8x128xf32>
    %c7_41 = arith.constant 7 : index
    %c0_42 = arith.constant 0 : index
    %c0_43 = arith.constant 0 : index
    %95 = vector.load %arg3[%c7_41, %c0_42, %c0_43] : memref<8x8x128xf32, #tpu.memory_space<vmem>>, vector<1x8x128xf32>
    %96 = vector.shape_cast %95 : vector<1x8x128xf32> to vector<8x128xf32>
    %97 = vector.shape_cast %94 : vector<8x128xf32> to vector<1x8x128xf32>
    tpu.vector_store %arg3[%c7_41, %c0_42, %c0_43], %97 {strides = array<i32>} : memref<8x8x128xf32, #tpu.memory_space<vmem>>, vector<1x8x128xf32>,
    return
  }
  func.func @transform_0(%arg0: i32) -> i32 {
    %c0_i32 = arith.constant 0 : i32
    %c0_i32_0 = arith.constant 0 : i32
    return %c0_i32 : i32
  }
  func.func @transform_1(%arg0: i32) -> (i32, i32, i32) {
    %c0_i32 = arith.constant 0 : i32
    %c0_i32_0 = arith.constant 0 : i32
    %c0_i32_1 = arith.constant 0 : i32
    return %c0_i32, %arg0, %c0_i32_0 : i32, i32, i32
  }
  func.func @transform_2(%arg0: i32) -> (i32, i32, i32) {
    %c0_i32 = arith.constant 0 : i32
    %c0_i32_0 = arith.constant 0 : i32
    %c0_i32_1 = arith.constant 0 : i32
    return %c0_i32, %arg0, %c0_i32_0 : i32, i32, i32
  }
}

</mosaic_0001>

<llo_original>
// kernel: tpu_custom_call.1
$region0: #{tpu_custom_call.1}
  #allocation0 [shape = 'u32[]', space=smem, size = 0x4, offset = 0x4, fixed_abs, tag = 'smem constant byte address 0x4 - core index']
  #allocation1 [shape = 'u32[144,128]{1,0:T(1,128)}', space=vmem, size = 0x12000, scoped, tag = 'internal scratch']
  %s0 = inlined_call_operand.hbm [shape: f32[8], index: 0, kind: input, shape index: {}]
  %s1 = inlined_call_operand.hbm [shape: f32[3,8,128], index: 1, kind: input, shape index: {}]
  %s2 = inlined_call_operand.hbm [shape: f32[8,8,128], index: 2, kind: output, shape index: {}]
  %s3 = sld [smem:[#allocation0]]
  $region26: #{tpu_custom_call.1} parent=0
    _
  %s5 = ssub.s32 1, %s3
  %s6 = scalar_select 0, %s5, %s3
  $region1: #{tpu_custom_call.1} parent=0
    #allocation2 [shape = 'u8[512]{0}', space=smem, size = 0x200, scoped, tag = 'input window, operand 0, single buffered']
    #allocation3 [shape = 's32[1]{0}', space=sflag, size = 0x4, scoped, tag = 'scoped memory for tpu_custom_call.1']
    #allocation4 [shape = 's32[1]{0}', space=sflag, size = 0x4, scoped, tag = 'scoped memory for tpu_custom_call.1']
    #allocation5 [shape = 's32[1]{0}', space=sflag, size = 0x4, scoped, tag = 'scoped memory for tpu_custom_call.1']
    #allocation6 [shape = 'u8[12288]{0}', space=vmem, size = 0x3000, scoped, tag = 'input window, operand 1, single buffered']
    #allocation7 [shape = 'u8[32768]{0}', space=vmem, size = 0x8000, scoped, tag = 'output window, operand 0, single buffered']
    %7 = vsyncpa [#allocation5], 0
    %8 = vsyncpa [#allocation3], 0
    %9 = vsyncpa [#allocation4], 0
    // Predicated region
    $region2: #{tpu_custom_call.1} parent=1 // pred_check
      _
    $region3: #{tpu_custom_call.1} parent=1 // pred_check_branch
      %11 = sbr.rel (0) target = $region5
    $region4: #{tpu_custom_call.1} parent=1 // pred_region
      %s13 = ssub.s32 16, 16
      %14 = vsyncadd [#allocation5], %s13
      %17 = dma.hbm_to_smem %s0, 16, [#allocation2], [#allocation5]
    $region5: #{tpu_custom_call.1} parent=1 // pred_fallthru
      _
    // Predicated region
    $region6: #{tpu_custom_call.1} parent=1 // pred_check
      _
    $region7: #{tpu_custom_call.1} parent=1 // pred_check_branch
      %19 = sbr.rel (0) target = $region9
    $region8: #{tpu_custom_call.1} parent=1 // pred_region
      %s21 = ssub.s32 384, 384
      %22 = vsyncadd [#allocation3], %s21
      %s23 = sshll.u32 [#allocation6], 4
      %s24 = int_to_ptr.vmem [resolvable:$true] %s23
      %29 = dma.hbm_to_vmem [thread:$0]  %s1, 384, %s24, [#allocation3], 128, 128, 8
    $region9: #{tpu_custom_call.1} parent=1 // pred_fallthru
      _
    // Predicated region
    $region10: #{tpu_custom_call.1} parent=1 // pred_check
      _
    $region11: #{tpu_custom_call.1} parent=1 // pred_check_branch
      %31 = sbr.rel (0) target = $region13
    $region12: #{tpu_custom_call.1} parent=1 // pred_region
      %32 = dma.done [#allocation5], 16
    $region13: #{tpu_custom_call.1} parent=1 // pred_fallthru
      _
    // Predicated region
    $region14: #{tpu_custom_call.1} parent=1 // pred_check
      _
    $region15: #{tpu_custom_call.1} parent=1 // pred_check_branch
      %34 = sbr.rel (0) target = $region17
    $region16: #{tpu_custom_call.1} parent=1 // pred_region
      %35 = dma.done [#allocation3], 384
    $region17: #{tpu_custom_call.1} parent=1 // pred_fallthru
      _
    %36 = sfence
    %v37 = vld [vmem:[#allocation6] sm:$0xff]
    %s38 = scalar_lea.vmem [#allocation6], 8
    %v39 = vld [vmem:[%s38] sm:$0xff]
    %s40 = scalar_lea.vmem [#allocation6], 16
    %v41 = vld [vmem:[%s40] sm:$0xff]
    %v42 = vmul.f32 %v37, %v37
    %v43 = vmul.f32 %v39, %v39
    %v44 = vadd.f32 %v42, %v43
    %v45 = vmul.f32 %v41, %v41
    %v46 = vadd.f32 %v44, %v45
    %v47 = vmax.f32 %v46, 1e-24
    %v48 = vrsqrt.pop %v47
    %v49 = vmul.f32 %v47, %v48
    %v50 = vmul.f32 %v49, 0.25
    %v51 = vsub.f32 1.0, %v50
    %v52 = vtanh.pop %v51
    %v53 = vmul.f32 %v52, %v52
    %v54 = vmul.f32 %v53, %v53
    %v55 = vmul.f32 %v54, %v53
    %v56 = vmul.f32 %v55, %v48
    %v57 = vmul.f32 %v56, 2.5622907
    %s58 = sld [smem:[#allocation2]]
    %s59 = smul.f32 %s58, 0.25
    %v60 = vstv %s59
    %v61 = vmul.f32 %v49, %v60
    %v62 = vand.u32 2147483647, %v61
    %vm63 = vcmp.le.f32.partialorder %v62, 0.7853982
    %vm64 = vcmp.lt.s32.totalorder %v61, 0
    %v65 = vand.u32 %v61, 2139095040
    %v66 = vshrl.u32 %v65, 23
    %v67 = vsub.s32 %v66, 127
    %v68 = vand.u32 2147483647, %v61
    %v69 = vand.u32 %v68, 8388607
    %v70 = vor.u32 %v69, 8388608
    %v71 = vsub.s32 0, %v70
    %v72 = vadd.s32 %v67, 1
    %vm73 = vcmp.gt.s32.totalorder %v72, 0
    %v74 = vsel %vm73, %v72, 0
    %v75 = vshrl.u32 %v74, 5
    %v76 = vand.u32 %v74, 31
    %v77 = vsub.s32 32, %v76
    %v78 = vshrl.u32 683565275, %v77
    %v79 = vshll.u32 683565275, %v76
    %v80 = vshrl.u32 2475754826, %v77
    %v81 = vor.u32 %v79, %v80
    %v82 = vshll.u32 2475754826, %v76
    %v83 = vshrl.u32 2131351028, %v77
    %v84 = vor.u32 %v82, %v83
    %v85 = vshll.u32 2131351028, %v76
    %v86 = vshrl.u32 2102212464, %v77
    %v87 = vor.u32 %v85, %v86
    %v88 = vshll.u32 2102212464, %v76
    %v89 = vshrl.u32 920167782, %v77
    %v90 = vor.u32 %v88, %v89
    %v91 = vshll.u32 920167782, %v76
    %v92 = vshrl.u32 1326507024, %v77
    %v93 = vor.u32 %v91, %v92
    %vm94 = vcmp.lt.s32.totalorder %v75, 1
    %vm95 = vcmp.lt.s32.totalorder %v75, 2
    %vm96 = vcmp.lt.s32.totalorder %v75, 3
    %vm97 = vcmp.lt.s32.totalorder %v75, 4
    %v98 = vsel %vm94, %v78, %v81
    %v99 = vsel %vm97, %v87, 2102212464
    %v100 = vsel %vm96, %v84, %v99
    %v101 = vsel %vm95, %v98, %v100
    %v102 = vsel %vm94, %v81, %v84
    %v103 = vsel %vm97, %v90, 920167782
    %v104 = vsel %vm96, %v87, %v103
    %v105 = vsel %vm95, %v102, %v104
    %v106 = vsel %vm94, %v84, %v87
    %v107 = vsel %vm97, %v93, 1326507024
    %v108 = vsel %vm96, %v90, %v107
    %v109 = vsel %vm95, %v106, %v108
    %v110 = vshll.u32 %v70, 8
    %v111 = vmul.u32.u64.compose %v110, %v109
    %v112 = vextract.low.u32 %v111
    %v113 = vextract.high.u32 %v111
    %v114 = vmul.u32.u64.compose %v110, %v105
    %v115 = vextract.low.u32 %v114
    %v116 = vextract.high.u32 %v114
    %v117 = vmul.u32 %v110, %v101
    %v118 = vadd.s32 %v113, %v115
    %vm119 = vc.u32 %v113, %v115
    %v120 = vadd.s32 %v116, 1
    %v121 = vsel %vm119, %v120, %v116
    %v122 = vadd.s32 %v117, %v121
    %v123 = vadd.s32 %v122, 536870912
    %v124 = vshrl.u32 %v123, 30
    %v125 = vshll.u32 %v124, 30
    %v126 = vsub.s32 %v122, %v125
    %vm127 = vcmp.lt.s32.totalorder %v126, 0
    %v128 = vsub.s32 0, %v126
    %v129 = vsel %vm127, %v128, %v126
    %v130 = vclz %v129
    %v131 = vsub.s32 %v130, 2
    %vm132 = vcmp.gt.s32.totalorder 0, %v131
    %v133 = vsel %vm132, 0, %v131
    %v134 = vsub.s32 32, %v133
    %v135 = vshll.u32 %v126, %v133
    %v136 = vshrl.u32 %v118, %v134
    %v137 = vor.u32 %v135, %v136
    %v138 = vsub.s32 4294967266, %v133
    %v139 = vadd.s32 %v138, 127
    %v140 = vshll.u32 %v139, 23
    %v141 = vor.u32 4788187, %v140
    %v142 = vand.u32 2147483647, %v141
    %v144 = vcvt.s32.f32 %v137
    %v145 = vmul.f32 %v144, %v142
    %v146 = vxor.u32 %v145, 2147483648
    %v147 = vsel %vm64, %v146, %v145
    %v148 = vsub.s32 4, %v124
    %v149 = vsel %vm64, %v148, %v124
    %v150 = vsel %vm63, %v61, %v147
    %v151 = vsel %vm63, 0, %v149
    %v152 = vcosq.f32.pop %v150
    %v153 = vsinq.f32.pop %v150
    %vm154 = vweird.f32 %v61
    %v155 = vadd.s32 %v151, 3
    %v156 = vand.u32 %v155, 3
    %vm157 = vcmp.lt.s32.totalorder %v156, 2
    %vm158 = vcmp.eq.s32.totalorder %v156, 0
    %v159 = vxor.u32 %v153, 2147483648
    %v160 = vsel %vm158, %v152, %v159
    %vm161 = vcmp.eq.s32.totalorder %v156, 2
    %v162 = vxor.u32 %v152, 2147483648
    %v163 = vsel %vm161, %v162, %v153
    %v164 = vsel %vm157, %v160, %v163
    %v165 = vsel %vm154, nan, %v164
    %v166 = vmul.f32 %v165, %v57
    %167 = vst [vmem:[#allocation7] sm:$0xff] %v166
    %s168 = sld [smem:[#allocation2 + $0x1]]
    %s169 = smul.f32 %s168, 0.25
    %v170 = vstv %s169
    %v171 = vmul.f32 %v49, %v170
    %v172 = vand.u32 2147483647, %v171
    %vm173 = vcmp.le.f32.partialorder %v172, 0.7853982
    %vm174 = vcmp.lt.s32.totalorder %v171, 0
    %v175 = vand.u32 %v171, 2139095040
    %v176 = vshrl.u32 %v175, 23
    %v177 = vsub.s32 %v176, 127
    %v178 = vand.u32 2147483647, %v171
    %v179 = vand.u32 %v178, 8388607
    %v180 = vor.u32 %v179, 8388608
    %v181 = vsub.s32 0, %v180
    %v182 = vadd.s32 %v177, 1
    %vm183 = vcmp.gt.s32.totalorder %v182, 0
    %v184 = vsel %vm183, %v182, 0
    %v185 = vshrl.u32 %v184, 5
    %v186 = vand.u32 %v184, 31
    %v187 = vsub.s32 32, %v186
    %v188 = vshrl.u32 683565275, %v187
    %v189 = vshll.u32 683565275, %v186
    %v190 = vshrl.u32 2475754826, %v187
    %v191 = vor.u32 %v189, %v190
    %v192 = vshll.u32 2475754826, %v186
    %v193 = vshrl.u32 2131351028, %v187
    %v194 = vor.u32 %v192, %v193
    %v195 = vshll.u32 2131351028, %v186
    %v196 = vshrl.u32 2102212464, %v187
    %v197 = vor.u32 %v195, %v196
    %v198 = vshll.u32 2102212464, %v186
    %v199 = vshrl.u32 920167782, %v187
    %v200 = vor.u32 %v198, %v199
    %v201 = vshll.u32 920167782, %v186
    %v202 = vshrl.u32 1326507024, %v187
    %v203 = vor.u32 %v201, %v202
    %vm204 = vcmp.lt.s32.totalorder %v185, 1
    %vm205 = vcmp.lt.s32.totalorder %v185, 2
    %vm206 = vcmp.lt.s32.totalorder %v185, 3
    %vm207 = vcmp.lt.s32.totalorder %v185, 4
    %v208 = vsel %vm204, %v188, %v191
    %v209 = vsel %vm207, %v197, 2102212464
    %v210 = vsel %vm206, %v194, %v209
    %v211 = vsel %vm205, %v208, %v210
    %v212 = vsel %vm204, %v191, %v194
    %v213 = vsel %vm207, %v200, 920167782
    %v214 = vsel %vm206, %v197, %v213
    %v215 = vsel %vm205, %v212, %v214
    %v216 = vsel %vm204, %v194, %v197
    %v217 = vsel %vm207, %v203, 1326507024
    %v218 = vsel %vm206, %v200, %v217
    %v219 = vsel %vm205, %v216, %v218
    %v220 = vshll.u32 %v180, 8
    %v221 = vmul.u32.u64.compose %v220, %v219
    %v222 = vextract.low.u32 %v221
    %v223 = vextract.high.u32 %v221
    %v224 = vmul.u32.u64.compose %v220, %v215
    %v225 = vextract.low.u32 %v224
    %v226 = vextract.high.u32 %v224
    %v227 = vmul.u32 %v220, %v211
    %v228 = vadd.s32 %v223, %v225
    %vm229 = vc.u32 %v223, %v225
    %v230 = vadd.s32 %v226, 1
    %v231 = vsel %vm229, %v230, %v226
    %v232 = vadd.s32 %v227, %v231
    %v233 = vadd.s32 %v232, 536870912
    %v234 = vshrl.u32 %v233, 30
    %v235 = vshll.u32 %v234, 30
    %v236 = vsub.s32 %v232, %v235
    %vm237 = vcmp.lt.s32.totalorder %v236, 0
    %v238 = vsub.s32 0, %v236
    %v239 = vsel %vm237, %v238, %v236
    %v240 = vclz %v239
    %v241 = vsub.s32 %v240, 2
    %vm242 = vcmp.gt.s32.totalorder 0, %v241
    %v243 = vsel %vm242, 0, %v241
    %v244 = vsub.s32 32, %v243
    %v245 = vshll.u32 %v236, %v243
    %v246 = vshrl.u32 %v228, %v244
    %v247 = vor.u32 %v245, %v246
    %v248 = vsub.s32 4294967266, %v243
    %v249 = vadd.s32 %v248, 127
    %v250 = vshll.u32 %v249, 23
    %v251 = vor.u32 4788187, %v250
    %v252 = vand.u32 2147483647, %v251
    %v254 = vcvt.s32.f32 %v247
    %v255 = vmul.f32 %v254, %v252
    %v256 = vxor.u32 %v255, 2147483648
    %v257 = vsel %vm174, %v256, %v255
    %v258 = vsub.s32 4, %v234
    %v259 = vsel %vm174, %v258, %v234
    %v260 = vsel %vm173, %v171, %v257
    %v261 = vsel %vm173, 0, %v259
    %v262 = vcosq.f32.pop %v260
    %v263 = vsinq.f32.pop %v260
    %vm264 = vweird.f32 %v171
    %v265 = vadd.s32 %v261, 3
    %v266 = vand.u32 %v265, 3
    %vm267 = vcmp.lt.s32.totalorder %v266, 2
    %vm268 = vcmp.eq.s32.totalorder %v266, 0
    %v269 = vxor.u32 %v263, 2147483648
    %v270 = vsel %vm268, %v262, %v269
    %vm271 = vcmp.eq.s32.totalorder %v266, 2
    %v272 = vxor.u32 %v262, 2147483648
    %v273 = vsel %vm271, %v272, %v263
    %v274 = vsel %vm267, %v270, %v273
    %v275 = vsel %vm264, nan, %v274
    %v276 = vmul.f32 %v275, %v57
    %s277 = scalar_lea.vmem [#allocation7], 8
    %278 = vst [vmem:[%s277] sm:$0xff] %v276
    %s279 = sld [smem:[#allocation2 + $0x2]]
    %s280 = smul.f32 %s279, 0.25
    %v281 = vstv %s280
    %v282 = vmul.f32 %v49, %v281
    %v283 = vand.u32 2147483647, %v282
    %vm284 = vcmp.le.f32.partialorder %v283, 0.7853982
    %vm285 = vcmp.lt.s32.totalorder %v282, 0
    %v286 = vand.u32 %v282, 2139095040
    %v287 = vshrl.u32 %v286, 23
    %v288 = vsub.s32 %v287, 127
    %v289 = vand.u32 2147483647, %v282
    %v290 = vand.u32 %v289, 8388607
    %v291 = vor.u32 %v290, 8388608
    %v292 = vsub.s32 0, %v291
    %v293 = vadd.s32 %v288, 1
    %vm294 = vcmp.gt.s32.totalorder %v293, 0
    %v295 = vsel %vm294, %v293, 0
    %v296 = vshrl.u32 %v295, 5
    %v297 = vand.u32 %v295, 31
    %v298 = vsub.s32 32, %v297
    %v299 = vshrl.u32 683565275, %v298
    %v300 = vshll.u32 683565275, %v297
    %v301 = vshrl.u32 2475754826, %v298
    %v302 = vor.u32 %v300, %v301
    %v303 = vshll.u32 2475754826, %v297
    %v304 = vshrl.u32 2131351028, %v298
    %v305 = vor.u32 %v303, %v304
    %v306 = vshll.u32 2131351028, %v297
    %v307 = vshrl.u32 2102212464, %v298
    %v308 = vor.u32 %v306, %v307
    %v309 = vshll.u32 2102212464, %v297
    %v310 = vshrl.u32 920167782, %v298
    %v311 = vor.u32 %v309, %v310
    %v312 = vshll.u32 920167782, %v297
    %v313 = vshrl.u32 1326507024, %v298
    %v314 = vor.u32 %v312, %v313
    %vm315 = vcmp.lt.s32.totalorder %v296, 1
    %vm316 = vcmp.lt.s32.totalorder %v296, 2
    %vm317 = vcmp.lt.s32.totalorder %v296, 3
    %vm318 = vcmp.lt.s32.totalorder %v296, 4
    %v319 = vsel %vm315, %v299, %v302
    %v320 = vsel %vm318, %v308, 2102212464
    %v321 = vsel %vm317, %v305, %v320
    %v322 = vsel %vm316, %v319, %v321
    %v323 = vsel %vm315, %v302, %v305
    %v324 = vsel %vm318, %v311, 920167782
    %v325 = vsel %vm317, %v308, %v324
    %v326 = vsel %vm316, %v323, %v325
    %v327 = vsel %vm315, %v305, %v308
    %v328 = vsel %vm318, %v314, 1326507024
    %v329 = vsel %vm317, %v311, %v328
    %v330 = vsel %vm316, %v327, %v329
    %v331 = vshll.u32 %v291, 8
    %v332 = vmul.u32.u64.compose %v331, %v330
    %v333 = vextract.low.u32 %v332
    %v334 = vextract.high.u32 %v332
    %v335 = vmul.u32.u64.compose %v331, %v326
    %v336 = vextract.low.u32 %v335
    %v337 = vextract.high.u32 %v335
    %v338 = vmul.u32 %v331, %v322
    %v339 = vadd.s32 %v334, %v336
    %vm340 = vc.u32 %v334, %v336
    %v341 = vadd.s32 %v337, 1
    %v342 = vsel %vm340, %v341, %v337
    %v343 = vadd.s32 %v338, %v342
    %v344 = vadd.s32 %v343, 536870912
    %v345 = vshrl.u32 %v344, 30
    %v346 = vshll.u32 %v345, 30
    %v347 = vsub.s32 %v343, %v346
    %vm348 = vcmp.lt.s32.totalorder %v347, 0
    %v349 = vsub.s32 0, %v347
    %v350 = vsel %vm348, %v349, %v347
    %v351 = vclz %v350
    %v352 = vsub.s32 %v351, 2
    %vm353 = vcmp.gt.s32.totalorder 0, %v352
    %v354 = vsel %vm353, 0, %v352
    %v355 = vsub.s32 32, %v354
    %v356 = vshll.u32 %v347, %v354
    %v357 = vshrl.u32 %v339, %v355
    %v358 = vor.u32 %v356, %v357
    %v359 = vsub.s32 4294967266, %v354
    %v360 = vadd.s32 %v359, 127
    %v361 = vshll.u32 %v360, 23
    %v362 = vor.u32 4788187, %v361
    %v363 = vand.u32 2147483647, %v362
    %v365 = vcvt.s32.f32 %v358
    %v366 = vmul.f32 %v365, %v363
    %v367 = vxor.u32 %v366, 2147483648
    %v368 = vsel %vm285, %v367, %v366
    %v369 = vsub.s32 4, %v345
    %v370 = vsel %vm285, %v369, %v345
    %v371 = vsel %vm284, %v282, %v368
    %v372 = vsel %vm284, 0, %v370
    %v373 = vcosq.f32.pop %v371
    %v374 = vsinq.f32.pop %v371
    %vm375 = vweird.f32 %v282
    %v376 = vadd.s32 %v372, 3
    %v377 = vand.u32 %v376, 3
    %vm378 = vcmp.lt.s32.totalorder %v377, 2
    %vm379 = vcmp.eq.s32.totalorder %v377, 0
    %v380 = vxor.u32 %v374, 2147483648
    %v381 = vsel %vm379, %v373, %v380
    %vm382 = vcmp.eq.s32.totalorder %v377, 2
    %v383 = vxor.u32 %v373, 2147483648
    %v384 = vsel %vm382, %v383, %v374
    %v385 = vsel %vm378, %v381, %v384
    %v386 = vsel %vm375, nan, %v385
    %v387 = vmul.f32 %v386, %v57
    %s388 = scalar_lea.vmem [#allocation7], 16
    %389 = vst [vmem:[%s388] sm:$0xff] %v387
    %s390 = sld [smem:[#allocation2 + $0x3]]
    %s391 = smul.f32 %s390, 0.25
    %v392 = vstv %s391
    %v393 = vmul.f32 %v49, %v392
    %v394 = vand.u32 2147483647, %v393
    %vm395 = vcmp.le.f32.partialorder %v394, 0.7853982
    %vm396 = vcmp.lt.s32.totalorder %v393, 0
    %v397 = vand.u32 %v393, 2139095040
    %v398 = vshrl.u32 %v397, 23
    %v399 = vsub.s32 %v398, 127
    %v400 = vand.u32 2147483647, %v393
    %v401 = vand.u32 %v400, 8388607
    %v402 = vor.u32 %v401, 8388608
    %v403 = vsub.s32 0, %v402
    %v404 = vadd.s32 %v399, 1
    %vm405 = vcmp.gt.s32.totalorder %v404, 0
    %v406 = vsel %vm405, %v404, 0
    %v407 = vshrl.u32 %v406, 5
    %v408 = vand.u32 %v406, 31
    %v409 = vsub.s32 32, %v408
    %v410 = vshrl.u32 683565275, %v409
    %v411 = vshll.u32 683565275, %v408
    %v412 = vshrl.u32 2475754826, %v409
    %v413 = vor.u32 %v411, %v412
    %v414 = vshll.u32 2475754826, %v408
    %v415 = vshrl.u32 2131351028, %v409
    %v416 = vor.u32 %v414, %v415
    %v417 = vshll.u32 2131351028, %v408
    %v418 = vshrl.u32 2102212464, %v409
    %v419 = vor.u32 %v417, %v418
    %v420 = vshll.u32 2102212464, %v408
    %v421 = vshrl.u32 920167782, %v409
    %v422 = vor.u32 %v420, %v421
    %v423 = vshll.u32 920167782, %v408
    %v424 = vshrl.u32 1326507024, %v409
    %v425 = vor.u32 %v423, %v424
    %vm426 = vcmp.lt.s32.totalorder %v407, 1
    %vm427 = vcmp.lt.s32.totalorder %v407, 2
    %vm428 = vcmp.lt.s32.totalorder %v407, 3
    %vm429 = vcmp.lt.s32.totalorder %v407, 4
    %v430 = vsel %vm426, %v410, %v413
    %v431 = vsel %vm429, %v419, 2102212464
    %v432 = vsel %vm428, %v416, %v431
    %v433 = vsel %vm427, %v430, %v432
    %v434 = vsel %vm426, %v413, %v416
    %v435 = vsel %vm429, %v422, 920167782
    %v436 = vsel %vm428, %v419, %v435
    %v437 = vsel %vm427, %v434, %v436
    %v438 = vsel %vm426, %v416, %v419
    %v439 = vsel %vm429, %v425, 1326507024
    %v440 = vsel %vm428, %v422, %v439
    %v441 = vsel %vm427, %v438, %v440
    %v442 = vshll.u32 %v402, 8
    %v443 = vmul.u32.u64.compose %v442, %v441
    %v444 = vextract.low.u32 %v443
    %v445 = vextract.high.u32 %v443
    %v446 = vmul.u32.u64.compose %v442, %v437
    %v447 = vextract.low.u32 %v446
    %v448 = vextract.high.u32 %v446
    %v449 = vmul.u32 %v442, %v433
    %v450 = vadd.s32 %v445, %v447
    %vm451 = vc.u32 %v445, %v447
    %v452 = vadd.s32 %v448, 1
    %v453 = vsel %vm451, %v452, %v448
    %v454 = vadd.s32 %v449, %v453
    %v455 = vadd.s32 %v454, 536870912
    %v456 = vshrl.u32 %v455, 30
    %v457 = vshll.u32 %v456, 30
    %v458 = vsub.s32 %v454, %v457
    %vm459 = vcmp.lt.s32.totalorder %v458, 0
    %v460 = vsub.s32 0, %v458
    %v461 = vsel %vm459, %v460, %v458
    %v462 = vclz %v461
    %v463 = vsub.s32 %v462, 2
    %vm464 = vcmp.gt.s32.totalorder 0, %v463
    %v465 = vsel %vm464, 0, %v463
    %v466 = vsub.s32 32, %v465
    %v467 = vshll.u32 %v458, %v465
    %v468 = vshrl.u32 %v450, %v466
    %v469 = vor.u32 %v467, %v468
    %v470 = vsub.s32 4294967266, %v465
    %v471 = vadd.s32 %v470, 127
    %v472 = vshll.u32 %v471, 23
    %v473 = vor.u32 4788187, %v472
    %v474 = vand.u32 2147483647, %v473
    %v476 = vcvt.s32.f32 %v469
    %v477 = vmul.f32 %v476, %v474
    %v478 = vxor.u32 %v477, 2147483648
    %v479 = vsel %vm396, %v478, %v477
    %v480 = vsub.s32 4, %v456
    %v481 = vsel %vm396, %v480, %v456
    %v482 = vsel %vm395, %v393, %v479
    %v483 = vsel %vm395, 0, %v481
    %v484 = vcosq.f32.pop %v482
    %v485 = vsinq.f32.pop %v482
    %vm486 = vweird.f32 %v393
    %v487 = vadd.s32 %v483, 3
    %v488 = vand.u32 %v487, 3
    %vm489 = vcmp.lt.s32.totalorder %v488, 2
    %vm490 = vcmp.eq.s32.totalorder %v488, 0
    %v491 = vxor.u32 %v485, 2147483648
    %v492 = vsel %vm490, %v484, %v491
    %vm493 = vcmp.eq.s32.totalorder %v488, 2
    %v494 = vxor.u32 %v484, 2147483648
    %v495 = vsel %vm493, %v494, %v485
    %v496 = vsel %vm489, %v492, %v495
    %v497 = vsel %vm486, nan, %v496
    %v498 = vmul.f32 %v497, %v57
    %s499 = scalar_lea.vmem [#allocation7], 24
    %500 = vst [vmem:[%s499] sm:$0xff] %v498
    %s501 = sld [smem:[#allocation2 + $0x4]]
    %s502 = smul.f32 %s501, 0.25
    %v503 = vstv %s502
    %v504 = vmul.f32 %v49, %v503
    %v505 = vand.u32 2147483647, %v504
    %vm506 = vcmp.le.f32.partialorder %v505, 0.7853982
    %vm507 = vcmp.lt.s32.totalorder %v504, 0
    %v508 = vand.u32 %v504, 2139095040
    %v509 = vshrl.u32 %v508, 23
    %v510 = vsub.s32 %v509, 127
    %v511 = vand.u32 2147483647, %v504
    %v512 = vand.u32 %v511, 8388607
    %v513 = vor.u32 %v512, 8388608
    %v514 = vsub.s32 0, %v513
    %v515 = vadd.s32 %v510, 1
    %vm516 = vcmp.gt.s32.totalorder %v515, 0
    %v517 = vsel %vm516, %v515, 0
    %v518 = vshrl.u32 %v517, 5
    %v519 = vand.u32 %v517, 31
    %v520 = vsub.s32 32, %v519
    %v521 = vshrl.u32 683565275, %v520
    %v522 = vshll.u32 683565275, %v519
    %v523 = vshrl.u32 2475754826, %v520
    %v524 = vor.u32 %v522, %v523
    %v525 = vshll.u32 2475754826, %v519
    %v526 = vshrl.u32 2131351028, %v520
    %v527 = vor.u32 %v525, %v526
    %v528 = vshll.u32 2131351028, %v519
    %v529 = vshrl.u32 2102212464, %v520
    %v530 = vor.u32 %v528, %v529
    %v531 = vshll.u32 2102212464, %v519
    %v532 = vshrl.u32 920167782, %v520
    %v533 = vor.u32 %v531, %v532
    %v534 = vshll.u32 920167782, %v519
    %v535 = vshrl.u32 1326507024, %v520
    %v536 = vor.u32 %v534, %v535
    %vm537 = vcmp.lt.s32.totalorder %v518, 1
    %vm538 = vcmp.lt.s32.totalorder %v518, 2
    %vm539 = vcmp.lt.s32.totalorder %v518, 3
    %vm540 = vcmp.lt.s32.totalorder %v518, 4
    %v541 = vsel %vm537, %v521, %v524
    %v542 = vsel %vm540, %v530, 2102212464
    %v543 = vsel %vm539, %v527, %v542
    %v544 = vsel %vm538, %v541, %v543
    %v545 = vsel %vm537, %v524, %v527
    %v546 = vsel %vm540, %v533, 920167782
    %v547 = vsel %vm539, %v530, %v546
    %v548 = vsel %vm538, %v545, %v547
    %v549 = vsel %vm537, %v527, %v530
    %v550 = vsel %vm540, %v536, 1326507024
    %v551 = vsel %vm539, %v533, %v550
    %v552 = vsel %vm538, %v549, %v551
    %v553 = vshll.u32 %v513, 8
    %v554 = vmul.u32.u64.compose %v553, %v552
    %v555 = vextract.low.u32 %v554
    %v556 = vextract.high.u32 %v554
    %v557 = vmul.u32.u64.compose %v553, %v548
    %v558 = vextract.low.u32 %v557
    %v559 = vextract.high.u32 %v557
    %v560 = vmul.u32 %v553, %v544
    %v561 = vadd.s32 %v556, %v558
    %vm562 = vc.u32 %v556, %v558
    %v563 = vadd.s32 %v559, 1
    %v564 = vsel %vm562, %v563, %v559
    %v565 = vadd.s32 %v560, %v564
    %v566 = vadd.s32 %v565, 536870912
    %v567 = vshrl.u32 %v566, 30
    %v568 = vshll.u32 %v567, 30
    %v569 = vsub.s32 %v565, %v568
    %vm570 = vcmp.lt.s32.totalorder %v569, 0
    %v571 = vsub.s32 0, %v569
    %v572 = vsel %vm570, %v571, %v569
    %v573 = vclz %v572
    %v574 = vsub.s32 %v573, 2
    %vm575 = vcmp.gt.s32.totalorder 0, %v574
    %v576 = vsel %vm575, 0, %v574
    %v577 = vsub.s32 32, %v576
    %v578 = vshll.u32 %v569, %v576
    %v579 = vshrl.u32 %v561, %v577
    %v580 = vor.u32 %v578, %v579
    %v581 = vsub.s32 4294967266, %v576
    %v582 = vadd.s32 %v581, 127
    %v583 = vshll.u32 %v582, 23
    %v584 = vor.u32 4788187, %v583
    %v585 = vand.u32 2147483647, %v584
    %v587 = vcvt.s32.f32 %v580
    %v588 = vmul.f32 %v587, %v585
    %v589 = vxor.u32 %v588, 2147483648
    %v590 = vsel %vm507, %v589, %v588
    %v591 = vsub.s32 4, %v567
    %v592 = vsel %vm507, %v591, %v567
    %v593 = vsel %vm506, %v504, %v590
    %v594 = vsel %vm506, 0, %v592
    %v595 = vcosq.f32.pop %v593
    %v596 = vsinq.f32.pop %v593
    %vm597 = vweird.f32 %v504
    %v598 = vadd.s32 %v594, 3
    %v599 = vand.u32 %v598, 3
    %vm600 = vcmp.lt.s32.totalorder %v599, 2
    %vm601 = vcmp.eq.s32.totalorder %v599, 0
    %v602 = vxor.u32 %v596, 2147483648
    %v603 = vsel %vm601, %v595, %v602
    %vm604 = vcmp.eq.s32.totalorder %v599, 2
    %v605 = vxor.u32 %v595, 2147483648
    %v606 = vsel %vm604, %v605, %v596
    %v607 = vsel %vm600, %v603, %v606
    %v608 = vsel %vm597, nan, %v607
    %v609 = vmul.f32 %v608, %v57
    %s610 = scalar_lea.vmem [#allocation7], 32
    %611 = vst [vmem:[%s610] sm:$0xff] %v609
    %s612 = sld [smem:[#allocation2 + $0x5]]
    %s613 = smul.f32 %s612, 0.25
    %v614 = vstv %s613
    %v615 = vmul.f32 %v49, %v614
    %v616 = vand.u32 2147483647, %v615
    %vm617 = vcmp.le.f32.partialorder %v616, 0.7853982
    %vm618 = vcmp.lt.s32.totalorder %v615, 0
    %v619 = vand.u32 %v615, 2139095040
    %v620 = vshrl.u32 %v619, 23
    %v621 = vsub.s32 %v620, 127
    %v622 = vand.u32 2147483647, %v615
    %v623 = vand.u32 %v622, 8388607
    %v624 = vor.u32 %v623, 8388608
    %v625 = vsub.s32 0, %v624
    %v626 = vadd.s32 %v621, 1
    %vm627 = vcmp.gt.s32.totalorder %v626, 0
    %v628 = vsel %vm627, %v626, 0
    %v629 = vshrl.u32 %v628, 5
    %v630 = vand.u32 %v628, 31
    %v631 = vsub.s32 32, %v630
    %v632 = vshrl.u32 683565275, %v631
    %v633 = vshll.u32 683565275, %v630
    %v634 = vshrl.u32 2475754826, %v631
    %v635 = vor.u32 %v633, %v634
    %v636 = vshll.u32 2475754826, %v630
    %v637 = vshrl.u32 2131351028, %v631
    %v638 = vor.u32 %v636, %v637
    %v639 = vshll.u32 2131351028, %v630
    %v640 = vshrl.u32 2102212464, %v631
    %v641 = vor.u32 %v639, %v640
    %v642 = vshll.u32 2102212464, %v630
    %v643 = vshrl.u32 920167782, %v631
    %v644 = vor.u32 %v642, %v643
    %v645 = vshll.u32 920167782, %v630
    %v646 = vshrl.u32 1326507024, %v631
    %v647 = vor.u32 %v645, %v646
    %vm648 = vcmp.lt.s32.totalorder %v629, 1
    %vm649 = vcmp.lt.s32.totalorder %v629, 2
    %vm650 = vcmp.lt.s32.totalorder %v629, 3
    %vm651 = vcmp.lt.s32.totalorder %v629, 4
    %v652 = vsel %vm648, %v632, %v635
    %v653 = vsel %vm651, %v641, 2102212464
    %v654 = vsel %vm650, %v638, %v653
    %v655 = vsel %vm649, %v652, %v654
    %v656 = vsel %vm648, %v635, %v638
    %v657 = vsel %vm651, %v644, 920167782
    %v658 = vsel %vm650, %v641, %v657
    %v659 = vsel %vm649, %v656, %v658
    %v660 = vsel %vm648, %v638, %v641
    %v661 = vsel %vm651, %v647, 1326507024
    %v662 = vsel %vm650, %v644, %v661
    %v663 = vsel %vm649, %v660, %v662
    %v664 = vshll.u32 %v624, 8
    %v665 = vmul.u32.u64.compose %v664, %v663
    %v666 = vextract.low.u32 %v665
    %v667 = vextract.high.u32 %v665
    %v668 = vmul.u32.u64.compose %v664, %v659
    %v669 = vextract.low.u32 %v668
    %v670 = vextract.high.u32 %v668
    %v671 = vmul.u32 %v664, %v655
    %v672 = vadd.s32 %v667, %v669
    %vm673 = vc.u32 %v667, %v669
    %v674 = vadd.s32 %v670, 1
    %v675 = vsel %vm673, %v674, %v670
    %v676 = vadd.s32 %v671, %v675
    %v677 = vadd.s32 %v676, 536870912
    %v678 = vshrl.u32 %v677, 30
    %v679 = vshll.u32 %v678, 30
    %v680 = vsub.s32 %v676, %v679
    %vm681 = vcmp.lt.s32.totalorder %v680, 0
    %v682 = vsub.s32 0, %v680
    %v683 = vsel %vm681, %v682, %v680
    %v684 = vclz %v683
    %v685 = vsub.s32 %v684, 2
    %vm686 = vcmp.gt.s32.totalorder 0, %v685
    %v687 = vsel %vm686, 0, %v685
    %v688 = vsub.s32 32, %v687
    %v689 = vshll.u32 %v680, %v687
    %v690 = vshrl.u32 %v672, %v688
    %v691 = vor.u32 %v689, %v690
    %v692 = vsub.s32 4294967266, %v687
    %v693 = vadd.s32 %v692, 127
    %v694 = vshll.u32 %v693, 23
    %v695 = vor.u32 4788187, %v694
    %v696 = vand.u32 2147483647, %v695
    %v698 = vcvt.s32.f32 %v691
    %v699 = vmul.f32 %v698, %v696
    %v700 = vxor.u32 %v699, 2147483648
    %v701 = vsel %vm618, %v700, %v699
    %v702 = vsub.s32 4, %v678
    %v703 = vsel %vm618, %v702, %v678
    %v704 = vsel %vm617, %v615, %v701
    %v705 = vsel %vm617, 0, %v703
    %v706 = vcosq.f32.pop %v704
    %v707 = vsinq.f32.pop %v704
    %vm708 = vweird.f32 %v615
    %v709 = vadd.s32 %v705, 3
    %v710 = vand.u32 %v709, 3
    %vm711 = vcmp.lt.s32.totalorder %v710, 2
    %vm712 = vcmp.eq.s32.totalorder %v710, 0
    %v713 = vxor.u32 %v707, 2147483648
    %v714 = vsel %vm712, %v706, %v713
    %vm715 = vcmp.eq.s32.totalorder %v710, 2
    %v716 = vxor.u32 %v706, 2147483648
    %v717 = vsel %vm715, %v716, %v707
    %v718 = vsel %vm711, %v714, %v717
    %v719 = vsel %vm708, nan, %v718
    %v720 = vmul.f32 %v719, %v57
    %s721 = scalar_lea.vmem [#allocation7], 40
    %722 = vst [vmem:[%s721] sm:$0xff] %v720
    %s723 = sld [smem:[#allocation2 + $0x6]]
    %s724 = smul.f32 %s723, 0.25
    %v725 = vstv %s724
    %v726 = vmul.f32 %v49, %v725
    %v727 = vand.u32 2147483647, %v726
    %vm728 = vcmp.le.f32.partialorder %v727, 0.7853982
    %vm729 = vcmp.lt.s32.totalorder %v726, 0
    %v730 = vand.u32 %v726, 2139095040
    %v731 = vshrl.u32 %v730, 23
    %v732 = vsub.s32 %v731, 127
    %v733 = vand.u32 2147483647, %v726
    %v734 = vand.u32 %v733, 8388607
    %v735 = vor.u32 %v734, 8388608
    %v736 = vsub.s32 0, %v735
    %v737 = vadd.s32 %v732, 1
    %vm738 = vcmp.gt.s32.totalorder %v737, 0
    %v739 = vsel %vm738, %v737, 0
    %v740 = vshrl.u32 %v739, 5
    %v741 = vand.u32 %v739, 31
    %v742 = vsub.s32 32, %v741
    %v743 = vshrl.u32 683565275, %v742
    %v744 = vshll.u32 683565275, %v741
    %v745 = vshrl.u32 2475754826, %v742
    %v746 = vor.u32 %v744, %v745
    %v747 = vshll.u32 2475754826, %v741
    %v748 = vshrl.u32 2131351028, %v742
    %v749 = vor.u32 %v747, %v748
    %v750 = vshll.u32 2131351028, %v741
    %v751 = vshrl.u32 2102212464, %v742
    %v752 = vor.u32 %v750, %v751
    %v753 = vshll.u32 2102212464, %v741
    %v754 = vshrl.u32 920167782, %v742
    %v755 = vor.u32 %v753, %v754
    %v756 = vshll.u32 920167782, %v741
    %v757 = vshrl.u32 1326507024, %v742
    %v758 = vor.u32 %v756, %v757
    %vm759 = vcmp.lt.s32.totalorder %v740, 1
    %vm760 = vcmp.lt.s32.totalorder %v740, 2
    %vm761 = vcmp.lt.s32.totalorder %v740, 3
    %vm762 = vcmp.lt.s32.totalorder %v740, 4
    %v763 = vsel %vm759, %v743, %v746
    %v764 = vsel %vm762, %v752, 2102212464
    %v765 = vsel %vm761, %v749, %v764
    %v766 = vsel %vm760, %v763, %v765
    %v767 = vsel %vm759, %v746, %v749
    %v768 = vsel %vm762, %v755, 920167782
    %v769 = vsel %vm761, %v752, %v768
    %v770 = vsel %vm760, %v767, %v769
    %v771 = vsel %vm759, %v749, %v752
    %v772 = vsel %vm762, %v758, 1326507024
    %v773 = vsel %vm761, %v755, %v772
    %v774 = vsel %vm760, %v771, %v773
    %v775 = vshll.u32 %v735, 8
    %v776 = vmul.u32.u64.compose %v775, %v774
    %v777 = vextract.low.u32 %v776
    %v778 = vextract.high.u32 %v776
    %v779 = vmul.u32.u64.compose %v775, %v770
    %v780 = vextract.low.u32 %v779
    %v781 = vextract.high.u32 %v779
    %v782 = vmul.u32 %v775, %v766
    %v783 = vadd.s32 %v778, %v780
    %vm784 = vc.u32 %v778, %v780
    %v785 = vadd.s32 %v781, 1
    %v786 = vsel %vm784, %v785, %v781
    %v787 = vadd.s32 %v782, %v786
    %v788 = vadd.s32 %v787, 536870912
    %v789 = vshrl.u32 %v788, 30
    %v790 = vshll.u32 %v789, 30
    %v791 = vsub.s32 %v787, %v790
    %vm792 = vcmp.lt.s32.totalorder %v791, 0
    %v793 = vsub.s32 0, %v791
    %v794 = vsel %vm792, %v793, %v791
    %v795 = vclz %v794
    %v796 = vsub.s32 %v795, 2
    %vm797 = vcmp.gt.s32.totalorder 0, %v796
    %v798 = vsel %vm797, 0, %v796
    %v799 = vsub.s32 32, %v798
    %v800 = vshll.u32 %v791, %v798
    %v801 = vshrl.u32 %v783, %v799
    %v802 = vor.u32 %v800, %v801
    %v803 = vsub.s32 4294967266, %v798
    %v804 = vadd.s32 %v803, 127
    %v805 = vshll.u32 %v804, 23
    %v806 = vor.u32 4788187, %v805
    %v807 = vand.u32 2147483647, %v806
    %v809 = vcvt.s32.f32 %v802
    %v810 = vmul.f32 %v809, %v807
    %v811 = vxor.u32 %v810, 2147483648
    %v812 = vsel %vm729, %v811, %v810
    %v813 = vsub.s32 4, %v789
    %v814 = vsel %vm729, %v813, %v789
    %v815 = vsel %vm728, %v726, %v812
    %v816 = vsel %vm728, 0, %v814
    %v817 = vcosq.f32.pop %v815
    %v818 = vsinq.f32.pop %v815
    %vm819 = vweird.f32 %v726
    %v820 = vadd.s32 %v816, 3
    %v821 = vand.u32 %v820, 3
    %vm822 = vcmp.lt.s32.totalorder %v821, 2
    %vm823 = vcmp.eq.s32.totalorder %v821, 0
    %v824 = vxor.u32 %v818, 2147483648
    %v825 = vsel %vm823, %v817, %v824
    %vm826 = vcmp.eq.s32.totalorder %v821, 2
    %v827 = vxor.u32 %v817, 2147483648
    %v828 = vsel %vm826, %v827, %v818
    %v829 = vsel %vm822, %v825, %v828
    %v830 = vsel %vm819, nan, %v829
    %v831 = vmul.f32 %v830, %v57
    %s832 = scalar_lea.vmem [#allocation7], 48
    %833 = vst [vmem:[%s832] sm:$0xff] %v831
    %s834 = sld [smem:[#allocation2 + $0x7]]
    %s835 = smul.f32 %s834, 0.25
    %v836 = vstv %s835
    %v837 = vmul.f32 %v49, %v836
    %v838 = vand.u32 2147483647, %v837
    %vm839 = vcmp.le.f32.partialorder %v838, 0.7853982
    %vm840 = vcmp.lt.s32.totalorder %v837, 0
    %v841 = vand.u32 %v837, 2139095040
    %v842 = vshrl.u32 %v841, 23
    %v843 = vsub.s32 %v842, 127
    %v844 = vand.u32 2147483647, %v837
    %v845 = vand.u32 %v844, 8388607
    %v846 = vor.u32 %v845, 8388608
    %v847 = vsub.s32 0, %v846
    %v848 = vadd.s32 %v843, 1
    %vm849 = vcmp.gt.s32.totalorder %v848, 0
    %v850 = vsel %vm849, %v848, 0
    %v851 = vshrl.u32 %v850, 5
    %v852 = vand.u32 %v850, 31
    %v853 = vsub.s32 32, %v852
    %v854 = vshrl.u32 683565275, %v853
    %v855 = vshll.u32 683565275, %v852
    %v856 = vshrl.u32 2475754826, %v853
    %v857 = vor.u32 %v855, %v856
    %v858 = vshll.u32 2475754826, %v852
    %v859 = vshrl.u32 2131351028, %v853
    %v860 = vor.u32 %v858, %v859
    %v861 = vshll.u32 2131351028, %v852
    %v862 = vshrl.u32 2102212464, %v853
    %v863 = vor.u32 %v861, %v862
    %v864 = vshll.u32 2102212464, %v852
    %v865 = vshrl.u32 920167782, %v853
    %v866 = vor.u32 %v864, %v865
    %v867 = vshll.u32 920167782, %v852
    %v868 = vshrl.u32 1326507024, %v853
    %v869 = vor.u32 %v867, %v868
    %vm870 = vcmp.lt.s32.totalorder %v851, 1
    %vm871 = vcmp.lt.s32.totalorder %v851, 2
    %vm872 = vcmp.lt.s32.totalorder %v851, 3
    %vm873 = vcmp.lt.s32.totalorder %v851, 4
    %v874 = vsel %vm870, %v854, %v857
    %v875 = vsel %vm873, %v863, 2102212464
    %v876 = vsel %vm872, %v860, %v875
    %v877 = vsel %vm871, %v874, %v876
    %v878 = vsel %vm870, %v857, %v860
    %v879 = vsel %vm873, %v866, 920167782
    %v880 = vsel %vm872, %v863, %v879
    %v881 = vsel %vm871, %v878, %v880
    %v882 = vsel %vm870, %v860, %v863
    %v883 = vsel %vm873, %v869, 1326507024
    %v884 = vsel %vm872, %v866, %v883
    %v885 = vsel %vm871, %v882, %v884
    %v886 = vshll.u32 %v846, 8
    %v887 = vmul.u32.u64.compose %v886, %v885
    %v888 = vextract.low.u32 %v887
    %v889 = vextract.high.u32 %v887
    %v890 = vmul.u32.u64.compose %v886, %v881
    %v891 = vextract.low.u32 %v890
    %v892 = vextract.high.u32 %v890
    %v893 = vmul.u32 %v886, %v877
    %v894 = vadd.s32 %v889, %v891
    %vm895 = vc.u32 %v889, %v891
    %v896 = vadd.s32 %v892, 1
    %v897 = vsel %vm895, %v896, %v892
    %v898 = vadd.s32 %v893, %v897
    %v899 = vadd.s32 %v898, 536870912
    %v900 = vshrl.u32 %v899, 30
    %v901 = vshll.u32 %v900, 30
    %v902 = vsub.s32 %v898, %v901
    %vm903 = vcmp.lt.s32.totalorder %v902, 0
    %v904 = vsub.s32 0, %v902
    %v905 = vsel %vm903, %v904, %v902
    %v906 = vclz %v905
    %v907 = vsub.s32 %v906, 2
    %vm908 = vcmp.gt.s32.totalorder 0, %v907
    %v909 = vsel %vm908, 0, %v907
    %v910 = vsub.s32 32, %v909
    %v911 = vshll.u32 %v902, %v909
    %v912 = vshrl.u32 %v894, %v910
    %v913 = vor.u32 %v911, %v912
    %v914 = vsub.s32 4294967266, %v909
    %v915 = vadd.s32 %v914, 127
    %v916 = vshll.u32 %v915, 23
    %v917 = vor.u32 4788187, %v916
    %v918 = vand.u32 2147483647, %v917
    %v920 = vcvt.s32.f32 %v913
    %v921 = vmul.f32 %v920, %v918
    %v922 = vxor.u32 %v921, 2147483648
    %v923 = vsel %vm840, %v922, %v921
    %v924 = vsub.s32 4, %v900
    %v925 = vsel %vm840, %v924, %v900
    %v926 = vsel %vm839, %v837, %v923
    %v927 = vsel %vm839, 0, %v925
    %v928 = vcosq.f32.pop %v926
    %v929 = vsinq.f32.pop %v926
    %vm930 = vweird.f32 %v837
    %v931 = vadd.s32 %v927, 3
    %v932 = vand.u32 %v931, 3
    %vm933 = vcmp.lt.s32.totalorder %v932, 2
    %vm934 = vcmp.eq.s32.totalorder %v932, 0
    %v935 = vxor.u32 %v929, 2147483648
    %v936 = vsel %vm934, %v928, %v935
    %vm937 = vcmp.eq.s32.totalorder %v932, 2
    %v938 = vxor.u32 %v928, 2147483648
    %v939 = vsel %vm937, %v938, %v929
    %v940 = vsel %vm933, %v936, %v939
    %v941 = vsel %vm930, nan, %v940
    %v942 = vmul.f32 %v941, %v57
    %s943 = scalar_lea.vmem [#allocation7], 56
    %944 = vst [vmem:[%s943] sm:$0xff] %v942
    // Predicated region
    $region18: #{tpu_custom_call.1} parent=1 // pred_check
      _
    $region19: #{tpu_custom_call.1} parent=1 // pred_check_branch
      %946 = sbr.rel (0) target = $region21
    $region20: #{tpu_custom_call.1} parent=1 // pred_region
      %s948 = ssub.s32 1024, 1024
      %949 = vsyncadd [#allocation4], %s948
      %s950 = sshll.u32 [#allocation7], 4
      %s951 = int_to_ptr.vmem [resolvable:$true] %s950
      %956 = dma.vmem_to_hbm [thread:$0]  %s951, 1024, %s2, [#allocation4], 128, 128, 8
    $region21: #{tpu_custom_call.1} parent=1 // pred_fallthru
      _
    // Predicated region
    $region22: #{tpu_custom_call.1} parent=1 // pred_check
      _
    $region23: #{tpu_custom_call.1} parent=1 // pred_check_branch
      %958 = sbr.rel (0) target = $region25
    $region24: #{tpu_custom_call.1} parent=1 // pred_region
      %959 = dma.done [#allocation4], 1024
    $region25: #{tpu_custom_call.1} parent=1 // pred_fallthru
      _
    %960 = vsyncpa [#allocation3], 1
    %961 = vsyncpa [#allocation4], 1
    %962 = vsyncpa [#allocation5], 1

</llo_original>
